<compile_context>
chip_gen: v7x
topology: tpu7x:2x2x1
jax: 0.10.0
libtpu: 0.0.40
codegen_flags: <defaults>
</compile_context>

<pallas_src>
import functools

import jax
import jax.numpy as jnp
from jax import lax
from jax.experimental import pallas as pl
from jax.experimental.pallas import tpu as pltpu

FEAT_DIM = 256     # stands for resnet50's 2048-channel feature dim (scaled down)
ATTN_DIM = 128     # stands for attn_dim=512 (scaled down)
OUT_CH = 8
PATCH = 8          # stride / kernel of the stand-in feature extractor
K_PAD = 256        # C*PATCH*PATCH = 192 zero-padded to 256 for MXU/lane alignment
SCALE = ATTN_DIM ** (-0.5)

# Tile sizes (kept small here so the pipelined / online-softmax paths run for
# multiple grid steps at the demo shapes; raise toward 512 at ResNet-scale
# token counts).
TRG_TILE = 32      # trg tokens per grid step (pool/conv kernel)
ATTN_TILE = 64     # orig tokens per grid step (fused conv+attention kernel)

VMEM_LIMIT = 32 * 1024 * 1024   # safe on v5e/v6e (128 MiB) and v7x (64 MiB)


# ----------------------------------------------------------------------------
# Kernel A: trg path = patchify conv + bias + ReLU + global average pool,
#           fused so the (B, S, F) feature map never touches HBM.
# ----------------------------------------------------------------------------
def _trg_pool_conv_kernel(x_ref, wc_ref, bc_ref, o_ref, *, inv_s):
    t = pl.program_id(0)

    @pl.when(t == 0)
    def _():
        o_ref[...] = jnp.zeros_like(o_ref)

    b, tile, kp = x_ref.shape
    x2 = x_ref[...].reshape(b * tile, kp)                        # bf16 tokens
    feat = jnp.dot(x2, wc_ref[...], preferred_element_type=jnp.float32)
    feat = jnp.maximum(feat + bc_ref[...], 0.0)                  # (b*tile, F) f32
    o_ref[...] += jnp.sum(feat.reshape(b, tile, -1), axis=1)     # per-image sum

    @pl.when(t == pl.num_programs(0) - 1)
    def _():
        o_ref[...] = o_ref[...] * inv_s                          # sum -> mean


def trg_pool_conv(patches, params, *, tile=TRG_TILE):
    """patches: (B, S, K_PAD) bf16 -> pooled trg feature vector (B, FEAT_DIM) f32."""
    B, S, Kp = patches.shape
    tile = min(tile, S)
    assert S % tile == 0, (S, tile)
    grid = (S // tile,)

    flops = 2 * B * S * Kp * FEAT_DIM
    byts = patches.size * 2 + Kp * FEAT_DIM * 2 + B * FEAT_DIM * 4

    return pl.pallas_call(
        functools.partial(_trg_pool_conv_kernel, inv_s=1.0 / S),
        out_shape=jax.ShapeDtypeStruct((B, FEAT_DIM), jnp.float32),
        grid=grid,
        in_specs=[
            pl.BlockSpec((B, tile, Kp), lambda t: (0, t, 0)),
            pl.BlockSpec((Kp, FEAT_DIM), lambda t: (0, 0)),
            pl.BlockSpec((1, FEAT_DIM), lambda t: (0, 0)),
        ],
        out_specs=pl.BlockSpec((B, FEAT_DIM), lambda t: (0, 0)),
        compiler_params=pltpu.CompilerParams(
            dimension_semantics=("arbitrary",),        # reduction axis (pool)
            vmem_limit_bytes=VMEM_LIMIT),
        cost_estimate=pl.CostEstimate(
            flops=int(flops), transcendentals=0, bytes_accessed=int(byts)),
    )(patches, params["wc"], params["bc"])


# ----------------------------------------------------------------------------
# Kernel B: orig path fused end-to-end:
#   patchify conv + ReLU  ->  k/v projections  ->  cross-attention with
#   online (flash-style) softmax over N-token chunks  ->  concat + Linear+Tanh.
# The (N, F) orig feature map and (N, A) k/v are never written to HBM.
# ----------------------------------------------------------------------------
def _fused_attn_kernel(patches_ref, trg_vec_ref, wc_ref, bc_ref,
                       wq_ref, bq_ref, wk_ref, bk_ref, wv_ref, bv_ref,
                       wot_ref, woa_ref, bo_ref, o_ref,
                       q_sc, m_sc, l_sc, acc_sc):
    c = pl.program_id(0)

    @pl.when(c == 0)
    def _():
        m_sc[...] = jnp.full_like(m_sc, -jnp.inf)
        l_sc[...] = jnp.zeros_like(l_sc)
        acc_sc[...] = jnp.zeros_like(acc_sc)
        # q projection of the pooled trg vector; computed once, kept in VMEM.
        q_sc[...] = (jnp.dot(trg_vec_ref[...].astype(jnp.bfloat16), wq_ref[...],
                             preferred_element_type=jnp.float32)
                     + bq_ref[...])

    # --- orig feature chunk: patchify conv + bias + ReLU (stays in VMEM) ----
    feat = jnp.dot(patches_ref[...], wc_ref[...],
                   preferred_element_type=jnp.float32)
    feat = jnp.maximum(feat + bc_ref[...], 0.0).astype(jnp.bfloat16)   # (TN, F)

    # --- k/v projections for this chunk ------------------------------------
    k = jnp.dot(feat, wk_ref[...], preferred_element_type=jnp.float32) + bk_ref[...]
    v = jnp.dot(feat, wv_ref[...], preferred_element_type=jnp.float32) + bv_ref[...]

    # --- scores over all B*h*w tokens (cross-batch, as k.view(1,-1,A)) -----
    s = lax.dot_general(q_sc[...], k, (((1,), (1,)), ((), ())),
                        preferred_element_type=jnp.float32) * SCALE    # (B, TN)

    # --- online softmax update ----------------------------------------------
    m_prev = m_sc[...]
    m_new = jnp.maximum(m_prev, jnp.max(s, axis=-1, keepdims=True))
    alpha = jnp.exp(m_prev - m_new)
    p = jnp.exp(s - m_new)
    l_sc[...] = alpha * l_sc[...] + jnp.sum(p, axis=-1, keepdims=True)
    acc_sc[...] = alpha * acc_sc[...] + jnp.dot(p, v,
                                                preferred_element_type=jnp.float32)
    m_sc[...] = m_new

    # --- finalize: normalize, concat([trg_vec, attn_out]) @ Wo + bo, tanh ---
    @pl.when(c == pl.num_programs(0) - 1)
    def _():
        attn_out = acc_sc[...] * pl.reciprocal(l_sc[...], approx=True)   # (B, A)
        trg_vec = trg_vec_ref[...]                                       # (B, F)
        logits = (jnp.dot(trg_vec, wot_ref[...], preferred_element_type=jnp.float32)
                  + jnp.dot(attn_out, woa_ref[...], preferred_element_type=jnp.float32)
                  + bo_ref[...])
        o_ref[...] = jnp.tanh(logits)


def fused_attention(orig_patches, trg_vec, params, *, tile=ATTN_TILE):
    """orig_patches: (N, K_PAD) bf16, trg_vec: (B, FEAT_DIM) f32 -> (B, OUT_CH) f32."""
    N, Kp = orig_patches.shape
    B = trg_vec.shape[0]
    tile = min(tile, N)
    assert N % tile == 0, (N, tile)
    grid = (N // tile,)

    full = lambda shape: pl.BlockSpec(shape, lambda c, _s=len(shape): (0,) * _s)

    flops = (2 * N * Kp * FEAT_DIM + 4 * N * FEAT_DIM * ATTN_DIM
             + 4 * B * N * ATTN_DIM + 2 * B * FEAT_DIM * ATTN_DIM
             + 2 * B * (FEAT_DIM + ATTN_DIM) * OUT_CH)
    byts = (orig_patches.size * 2 + Kp * FEAT_DIM * 2
            + 3 * FEAT_DIM * ATTN_DIM * 2 + B * FEAT_DIM * 4 + B * OUT_CH * 4)

    return pl.pallas_call(
        _fused_attn_kernel,
        out_shape=jax.ShapeDtypeStruct((B, OUT_CH), jnp.float32),
        grid=grid,
        in_specs=[
            pl.BlockSpec((tile, Kp), lambda c: (c, 0)),      # orig patch chunk
            full((B, FEAT_DIM)),                             # pooled trg vector
            full((Kp, FEAT_DIM)), full((1, FEAT_DIM)),       # Wc, bc
            full((FEAT_DIM, ATTN_DIM)), full((1, ATTN_DIM)), # Wq, bq
            full((FEAT_DIM, ATTN_DIM)), full((1, ATTN_DIM)), # Wk, bk
            full((FEAT_DIM, ATTN_DIM)), full((1, ATTN_DIM)), # Wv, bv
            full((FEAT_DIM, OUT_CH)), full((ATTN_DIM, OUT_CH)),  # Wout (split)
            full((1, OUT_CH)),                               # bout
        ],
        out_specs=full((B, OUT_CH)),
        scratch_shapes=[
            pltpu.VMEM((B, ATTN_DIM), jnp.float32),   # q
            pltpu.VMEM((B, 1), jnp.float32),          # running max m
            pltpu.VMEM((B, 1), jnp.float32),          # running denom l
            pltpu.VMEM((B, ATTN_DIM), jnp.float32),   # running weighted-v acc
        ],
        compiler_params=pltpu.CompilerParams(
            dimension_semantics=("arbitrary",),       # online-softmax reduction
            vmem_limit_bytes=VMEM_LIMIT),
        cost_estimate=pl.CostEstimate(
            flops=int(flops), transcendentals=int(2 * B * N + B * OUT_CH),
            bytes_accessed=int(byts)),
    )(orig_patches, trg_vec,
      params["wc"], params["bc"],
      params["wq"], params["bq"], params["wk"], params["bk"],
      params["wv"], params["bv"],
      params["wo_t"], params["wo_a"], params["bo"])


# ----------------------------------------------------------------------------
# Glue
# ----------------------------------------------------------------------------
def im2col(x, patch, k_pad=K_PAD):
    """NCHW image -> (B*hp*wp, k_pad) bf16 token matrix, rows in (b, h, w) order
    (matches x.permute(0,2,3,1).view(-1, C) used by the PyTorch attention block).
    Contraction dim is zero-padded to k_pad for MXU/lane alignment."""
    B, C, H, W = x.shape
    hp, wp = H // patch, W // patch
    x = x.reshape(B, C, hp, patch, wp, patch)
    x = x.transpose(0, 2, 4, 1, 3, 5)                    # (B, hp, wp, C, P, P)
    cols = x.reshape(B * hp * wp, C * patch * patch)
    k = cols.shape[1]
    if k < k_pad:
        cols = jnp.pad(cols, ((0, 0), (0, k_pad - k)))
    return cols.astype(jnp.bfloat16), (B, hp, wp)


def forward(orig_img, trg_img, params):
    # trg path: patchify conv + ReLU + global avg-pool fused into one kernel.
    trg_patches, (B, hp, wp) = im2col(trg_img, PATCH)
    trg_patches = trg_patches.reshape(B, hp * wp, K_PAD)
    trg_vec = trg_pool_conv(trg_patches, params)          # (B, FEAT_DIM) f32

    # orig path: patchify conv fused into the chunked cross-attention kernel.
    orig_patches, _ = im2col(orig_img, PATCH)             # (B*h*w, K_PAD) bf16
    return fused_attention(orig_patches, trg_vec, params)  # (B, OUT_CH)


# ----------------------------------------------------------------------------
# Pure-JAX reference (same math / same dtype casts) for a correctness check.
# ----------------------------------------------------------------------------
def forward_ref(orig_img, trg_img, params):
    mm = lambda a, b: jnp.dot(a, b, preferred_element_type=jnp.float32)
    trg_p, (B, hp, wp) = im2col(trg_img, PATCH)
    orig_p, _ = im2col(orig_img, PATCH)

    trg_feat = jnp.maximum(mm(trg_p, params["wc"]) + params["bc"], 0.0)
    trg_vec = trg_feat.reshape(B, hp * wp, FEAT_DIM).mean(axis=1)

    orig_feat = jnp.maximum(mm(orig_p, params["wc"]) + params["bc"],
                            0.0).astype(jnp.bfloat16)

    q = mm(trg_vec.astype(jnp.bfloat16), params["wq"]) + params["bq"]
    k = mm(orig_feat, params["wk"]) + params["bk"]
    v = mm(orig_feat, params["wv"]) + params["bv"]

    attn = mm(q, k.T) * SCALE                       # (B, N) over all batch tokens
    p = jax.nn.softmax(attn, axis=-1)
    attn_out = mm(p, v)

    logits = (mm(trg_vec, params["wo_t"]) + mm(attn_out, params["wo_a"])
              + params["bo"])
    return jnp.tanh(logits)


def init_params(key):
    ks = jax.random.split(key, 11)

    def n(k, shape, s=0.05, dtype=jnp.float32):
        return (s * jax.random.normal(k, shape, jnp.float32)).astype(dtype)

    return dict(
        # stand-in conv: (K_PAD, FEAT_DIM); rows >= C*P*P multiply zero-padded
        # patch columns, so they contribute nothing (exact equivalence).
        wc=n(ks[0], (K_PAD, FEAT_DIM), dtype=jnp.bfloat16),
        bc=n(ks[1], (1, FEAT_DIM), 0.01),
        # q/k/v projections (torch Linear weights pre-transposed to (in, out))
        wq=n(ks[2], (FEAT_DIM, ATTN_DIM), dtype=jnp.bfloat16),
        bq=n(ks[3], (1, ATTN_DIM), 0.01),
        wk=n(ks[4], (FEAT_DIM, ATTN_DIM), dtype=jnp.bfloat16),
        bk=n(ks[5], (1, ATTN_DIM), 0.01),
        wv=n(ks[6], (FEAT_DIM, ATTN_DIM), dtype=jnp.bfloat16),
        bv=n(ks[7], (1, ATTN_DIM), 0.01),
        # out projection split across the concat([trg_vec, attn_out]) boundary
        wo_t=n(ks[8], (FEAT_DIM, OUT_CH)),
        wo_a=n(ks[9], (ATTN_DIM, OUT_CH)),
        bo=n(ks[10], (1, OUT_CH), 0.01),
    )


if __name__ == "__main__":
    key = jax.random.PRNGKey(0)
    k_orig, k_trg, k_par = jax.random.split(key, 3)

    # Small but non-degenerate: 8x8 patches per image -> 64 trg tokens,
    # 128 orig tokens, so both grids run multiple pipelined steps.
    B, C, H, W = 2, 3, 64, 64
    orig_img = jax.random.normal(k_orig, (B, C, H, W), jnp.float32)
    trg_img = jax.random.normal(k_trg, (B, C, H, W), jnp.float32)
    params = init_params(k_par)

    out = jax.block_until_ready(forward(orig_img, trg_img, params))
    ref = jax.block_until_ready(forward_ref(orig_img, trg_img, params))

    assert out.shape == (B, OUT_CH), out.shape
    assert bool(jnp.all(jnp.isfinite(out)))
    err = float(jnp.max(jnp.abs(out - ref)))
    assert err < 2e-2, f"max abs err vs reference: {err}"
    print("KERNEL_OK")
</pallas_src>

<mosaic_0001>
module attributes {stable_mosaic.version = 11 : i64} {
  func.func @_trg_pool_conv_kernel(%arg0: i32, %arg1: memref<2x32x256xbf16, #tpu.memory_space<vmem>>, %arg2: memref<256x256xbf16, #tpu.memory_space<vmem>>, %arg3: memref<1x256xf32, #tpu.memory_space<vmem>>, %arg4: memref<2x256xf32, #tpu.memory_space<vmem>>) attributes {dimension_semantics = [#tpu.dimension_semantics<arbitrary>], iteration_bounds = array<i64: 2>, scalar_prefetch = 0 : i64, scratch_operands = 0 : i64, tpu.core_type = #tpu.core_type<tc>, window_params = [{transform_indices = @transform_0, window_bounds = array<i64: 2, 32, 256>}, {pipeline_mode = #tpu.pipeline_mode<synchronous>, transform_indices = @transform_1, window_bounds = array<i64: 256, 256>}, {pipeline_mode = #tpu.pipeline_mode<synchronous>, transform_indices = @transform_2, window_bounds = array<i64: 1, 256>}, {pipeline_mode = #tpu.pipeline_mode<synchronous>, transform_indices = @transform_3, window_bounds = array<i64: 2, 256>}]} {
    %c0_i32 = arith.constant 0 : i32
    %0 = arith.cmpi eq, %arg0, %c0_i32 : i32
    %1 = arith.extui %0 : i1 to i32
    %c0_i32_0 = arith.constant 0 : i32
    %2 = arith.cmpi ne, %1, %c0_i32_0 : i32
    scf.if %2 {
      %cst_14 = arith.constant 0.000000e+00 : f32
      %20 = vector.broadcast %cst_14 : f32 to vector<2x256xf32>
      %c0_15 = arith.constant 0 : index
      %c0_16 = arith.constant 0 : index
      %21 = vector.load %arg4[%c0_15, %c0_16] : memref<2x256xf32, #tpu.memory_space<vmem>>, vector<2x256xf32>
      tpu.vector_store %arg4[%c0_15, %c0_16], %20 {strides = array<i32>} : memref<2x256xf32, #tpu.memory_space<vmem>>, vector<2x256xf32>,
    } else {
    }
    %c0 = arith.constant 0 : index
    %c0_1 = arith.constant 0 : index
    %c0_2 = arith.constant 0 : index
    %3 = vector.load %arg1[%c0, %c0_1, %c0_2] : memref<2x32x256xbf16, #tpu.memory_space<vmem>>, vector<2x32x256xbf16>
    %4 = vector.shape_cast %3 : vector<2x32x256xbf16> to vector<64x256xbf16>
    %c0_3 = arith.constant 0 : index
    %c0_4 = arith.constant 0 : index
    %5 = vector.load %arg2[%c0_3, %c0_4] : memref<256x256xbf16, #tpu.memory_space<vmem>>, vector<256x256xbf16>
    %cst = arith.constant dense<0.000000e+00> : vector<64x256xf32>
    %6 = tpu.matmul %4, %5, %cst {dimension_numbers = #tpu.dot_dimension_numbers<[1], [0], [0], [1], [0, 0, 1, 1], [], []>} : vector<64x256xbf16>, vector<256x256xbf16>, vector<64x256xf32> -> vector<64x256xf32>
    %c0_5 = arith.constant 0 : index
    %c0_6 = arith.constant 0 : index
    %7 = vector.load %arg3[%c0_5, %c0_6] : memref<1x256xf32, #tpu.memory_space<vmem>>, vector<1x256xf32>
    %8 = vector.broadcast %7 : vector<1x256xf32> to vector<64x256xf32>
    %9 = arith.addf %6, %8 : vector<64x256xf32>
    %cst_7 = arith.constant 0.000000e+00 : f32
    %10 = vector.broadcast %cst_7 : f32 to vector<64x256xf32>
    %11 = arith.maximumf %9, %10 : vector<64x256xf32>
    %c0_8 = arith.constant 0 : index
    %c0_9 = arith.constant 0 : index
    %12 = vector.load %arg4[%c0_8, %c0_9] : memref<2x256xf32, #tpu.memory_space<vmem>>, vector<2x256xf32>
    %13 = vector.shape_cast %11 : vector<64x256xf32> to vector<2x32x256xf32>
    %cst_10 = arith.constant dense<0.000000e+00> : vector<2x256xf32>
    %14 = vector.multi_reduction <add>, %13, %cst_10 [1] : vector<2x32x256xf32> to vector<2x256xf32>
    %15 = arith.addf %12, %14 : vector<2x256xf32>
    %c0_11 = arith.constant 0 : index
    %c0_12 = arith.constant 0 : index
    %16 = vector.load %arg4[%c0_11, %c0_12] : memref<2x256xf32, #tpu.memory_space<vmem>>, vector<2x256xf32>
    tpu.vector_store %arg4[%c0_11, %c0_12], %15 {strides = array<i32>} : memref<2x256xf32, #tpu.memory_space<vmem>>, vector<2x256xf32>,
    %c1_i32 = arith.constant 1 : i32
    %17 = arith.cmpi eq, %arg0, %c1_i32 : i32
    %18 = arith.extui %17 : i1 to i32
    %c0_i32_13 = arith.constant 0 : i32
    %19 = arith.cmpi ne, %18, %c0_i32_13 : i32
    scf.if %19 {
      %c0_14 = arith.constant 0 : index
      %c0_15 = arith.constant 0 : index
      %20 = vector.load %arg4[%c0_14, %c0_15] : memref<2x256xf32, #tpu.memory_space<vmem>>, vector<2x256xf32>
      %cst_16 = arith.constant 1.562500e-02 : f32
      %21 = vector.broadcast %cst_16 : f32 to vector<2x256xf32>
      %22 = arith.mulf %20, %21 : vector<2x256xf32>
      %c0_17 = arith.constant 0 : index
      %c0_18 = arith.constant 0 : index
      %23 = vector.load %arg4[%c0_17, %c0_18] : memref<2x256xf32, #tpu.memory_space<vmem>>, vector<2x256xf32>
      tpu.vector_store %arg4[%c0_17, %c0_18], %22 {strides = array<i32>} : memref<2x256xf32, #tpu.memory_space<vmem>>, vector<2x256xf32>,
    } else {
    }
    return
  }
  func.func @transform_0(%arg0: i32) -> (i32, i32, i32) {
    %c0_i32 = arith.constant 0 : i32
    %c0_i32_0 = arith.constant 0 : i32
    %c0_i32_1 = arith.constant 0 : i32
    return %c0_i32, %arg0, %c0_i32_0 : i32, i32, i32
  }
  func.func @transform_1(%arg0: i32) -> (i32, i32) {
    %c0_i32 = arith.constant 0 : i32
    %c0_i32_0 = arith.constant 0 : i32
    %c0_i32_1 = arith.constant 0 : i32
    return %c0_i32, %c0_i32_0 : i32, i32
  }
  func.func @transform_2(%arg0: i32) -> (i32, i32) {
    %c0_i32 = arith.constant 0 : i32
    %c0_i32_0 = arith.constant 0 : i32
    %c0_i32_1 = arith.constant 0 : i32
    return %c0_i32, %c0_i32_0 : i32, i32
  }
  func.func @transform_3(%arg0: i32) -> (i32, i32) {
    %c0_i32 = arith.constant 0 : i32
    %c0_i32_0 = arith.constant 0 : i32
    %c0_i32_1 = arith.constant 0 : i32
    return %c0_i32, %c0_i32_0 : i32, i32
  }
}

</mosaic_0001>

<llo_original>
// kernel: tpu_custom_call.1
$region0: #{tpu_custom_call.1}
  #allocation0 [shape = 'u32[]', space=smem, size = 0x4, offset = 0x4, fixed_abs, tag = 'smem constant byte address 0x4 - core index']
  #allocation1 [shape = 'u32[144,128]{1,0:T(1,128)}', space=vmem, size = 0x12000, scoped, tag = 'internal scratch']
  #allocation8 [shape = 's32[]', space=sflag, size = 0x4, offset = 0, fixed_abs, tag = 'sflag constant byte address 0x0 - dummy sync flag']
  %s0 = inlined_call_operand.hbm [shape: bf16[2,64,256], index: 0, kind: input, shape index: {}]
  %s1 = inlined_call_operand.hbm [shape: bf16[256,256], index: 1, kind: input, shape index: {}]
  %s2 = inlined_call_operand.vmem [shape: f32[1,256], index: 2, kind: input, shape index: {}]
  %s3 = inlined_call_operand.hbm [shape: f32[2,256], index: 3, kind: output, shape index: {}]
  %s4 = sld [smem:[#allocation0]]
  $region61: #{tpu_custom_call.1} parent=0
    _
  %s6 = ssub.s32 1, %s4
  %s7 = scalar_select 0, %s6, %s4
  $region1: #{tpu_custom_call.1} parent=0
    #allocation2 [shape = 'u8[65536]{0}', space=vmem, size = 0x10000, scoped, tag = 'input window, operand 0']
    #allocation3 [shape = 's32[2]{0}', space=sflag, size = 0x8, scoped, tag = 'scoped memory for tpu_custom_call.1']
    #allocation4 [shape = 's32[2]{0}', space=sflag, size = 0x8, scoped, tag = 'scoped memory for tpu_custom_call.1']
    #allocation5 [shape = 'u8[131072]{0}', space=vmem, size = 0x20000, scoped, tag = 'input window, operand 1, single buffered']
    #allocation6 [shape = 's32[1]{0}', space=sflag, size = 0x4, scoped, tag = 'scoped memory for tpu_custom_call.1']
    #allocation7 [shape = 'u8[2048]{0}', space=vmem, size = 0x800, scoped, tag = 'output window, operand 0, single buffered']
    %8 = vsyncpa [#allocation3], 0
    %s9 = scalar_lea.sflag [#allocation3], 1
    %10 = vsyncpa %s9, 0
    %11 = vsyncpa [#allocation6], 0
    %12 = vsyncpa [#allocation4], 0
    loop: start=0, step=1, limit=4
    $region2: #{tpu_custom_call.1} parent=1 // loop_pre_header
      _
    $region3: #{tpu_custom_call.1} parent=1 // loop_header
      %s14 = sphi 0, %s18
      %p15 = scmp.ge.s32.totalorder %s14, 4
      %s24 = sphi 0, %s26
      %s27 = sphi 0, %s24
      %s28 = sphi 0, %s27
      %s44 = sphi 0, %s28
      %s48 = sphi 0, %s48
      %s50 = sphi 0, %s48
      %s51 = sphi 0, %s50
      %s65 = sphi 0, %s51
      %s69 = sphi 0, %s69
      %s71 = sphi 0, %s69
      %s72 = sphi 0, %s71
      %s86 = sphi 0, %s72
      %s90 = sphi 0, %s90
      %s92 = sphi 0, %s90
      %s93 = sphi 0, %s92
      %s107 = sphi 0, %s93
    $region4: #{tpu_custom_call.1} parent=1 // loop_header_branch
      %17 = sbr.rel (%p15) target = $region8
    $region5: #{tpu_custom_call.1} parent=1 // loop_body
      %s19 = ssub.s32 %s14, 1
      %s20 = ssub.s32 %s14, 2
      %s21 = sadd.s32 %s14, 1
      %s22 = ssub.s32 %s14, %s21
      %p23 = scmp.eq.s32.totalorder %s22, 0
      %s25 = sadd.s32 %s24, 1
      %s26 = scalar_select %p23, %s24, %s25
      %p29 = pneg %p23
      %p30 = scmp.eq.s32.totalorder %s14, 1
      %p31 = por %p29, %p30
      %p32 = scmp.ne.s32.totalorder %s24, %s27
      %p33 = scmp.eq.s32.totalorder %s14, 0
      %p34 = por %p32, %p33
      %p35 = scmp.ne.s32.totalorder %s24, %s27
      %p36 = scmp.eq.s32.totalorder %s19, 1
      %p37 = por %p35, %p36
      %p38 = scmp.ne.s32.totalorder %s27, %s28
      %p39 = scmp.eq.s32.totalorder %s19, 0
      %p40 = por %p38, %p39
      %p41 = scmp.ne.s32.totalorder %s27, %s28
      %p42 = scmp.eq.s32.totalorder %s20, 1
      %p43 = por %p41, %p42
      %p45 = scmp.ne.s32.totalorder %s28, %s44
      %p46 = scmp.eq.s32.totalorder %s20, 0
      %p47 = por %p45, %p46
      %s49 = sadd.s32 %s48, 1
      %p52 = scmp.eq.s32.totalorder %s14, 1
      %p53 = scmp.ne.s32.totalorder %s48, %s50
      %p54 = scmp.eq.s32.totalorder %s14, 0
      %p55 = por %p53, %p54
      %p56 = scmp.ne.s32.totalorder %s48, %s50
      %p57 = scmp.eq.s32.totalorder %s19, 1
      %p58 = por %p56, %p57
      %p59 = scmp.ne.s32.totalorder %s50, %s51
      %p60 = scmp.eq.s32.totalorder %s19, 0
      %p61 = por %p59, %p60
      %p62 = scmp.ne.s32.totalorder %s50, %s51
      %p63 = scmp.eq.s32.totalorder %s20, 1
      %p64 = por %p62, %p63
      %p66 = scmp.ne.s32.totalorder %s51, %s65
      %p67 = scmp.eq.s32.totalorder %s20, 0
      %p68 = por %p66, %p67
      %s70 = sadd.s32 %s69, 1
      %p73 = scmp.eq.s32.totalorder %s14, 1
      %p74 = scmp.ne.s32.totalorder %s69, %s71
      %p75 = scmp.eq.s32.totalorder %s14, 0
      %p76 = por %p74, %p75
      %p77 = scmp.ne.s32.totalorder %s69, %s71
      %p78 = scmp.eq.s32.totalorder %s19, 1
      %p79 = por %p77, %p78
      %p80 = scmp.ne.s32.totalorder %s71, %s72
      %p81 = scmp.eq.s32.totalorder %s19, 0
      %p82 = por %p80, %p81
      %p83 = scmp.ne.s32.totalorder %s71, %s72
      %p84 = scmp.eq.s32.totalorder %s20, 1
      %p85 = por %p83, %p84
      %p87 = scmp.ne.s32.totalorder %s72, %s86
      %p88 = scmp.eq.s32.totalorder %s20, 0
      %p89 = por %p87, %p88
      %s91 = sadd.s32 %s90, 1
      %p94 = scmp.eq.s32.totalorder %s14, 1
      %p95 = scmp.ne.s32.totalorder %s90, %s92
      %p96 = scmp.eq.s32.totalorder %s14, 0
      %p97 = por %p95, %p96
      %p98 = scmp.ne.s32.totalorder %s90, %s92
      %p99 = scmp.eq.s32.totalorder %s19, 1
      %p100 = por %p98, %p99
      %p101 = scmp.ne.s32.totalorder %s92, %s93
      %p102 = scmp.eq.s32.totalorder %s19, 0
      %p103 = por %p101, %p102
      %p104 = scmp.ne.s32.totalorder %s92, %s93
      %p105 = scmp.eq.s32.totalorder %s20, 1
      %p106 = por %p104, %p105
      %p108 = scmp.ne.s32.totalorder %s93, %s107
      %p109 = scmp.eq.s32.totalorder %s20, 0
      %p110 = por %p108, %p109
      %p111 = scmp.le.s32.totalorder 1, %s14
      %p112 = scmp.lt.s32.totalorder %s14, 3
      %p113 = pnand %p111, %p112
      %p114 = pneg %p113
      // Predicated region
      $region9: #{tpu_custom_call.1} parent=5 // pred_check
        _
      $region10: #{tpu_custom_call.1} parent=5 // pred_check_branch
        %116 = sbr.rel (%p113) target = $region12
      $region11: #{tpu_custom_call.1} parent=5 // pred_region
        %s117 = ssub.s32 %s14, 1
        // Predicated region
        $region13: #{tpu_custom_call.1} parent=11 // pred_check
          %p118 = pneg %p61
        $region14: #{tpu_custom_call.1} parent=11 // pred_check_branch
          %120 = sbr.rel (%p118) target = $region16
        $region15: #{tpu_custom_call.1} parent=11 // pred_region
          %s122 = ssub.s32 4096, 4096
          %123 = vsyncadd [#allocation6], %s122
          %s124 = sshll.u32 [#allocation5], 4
          %s125 = int_to_ptr.vmem [resolvable:$true] %s124
          %130 = dma.hbm_to_vmem [thread:$0]  %s1, 4096, %s125, [#allocation6], 128, 128, 8
        $region16: #{tpu_custom_call.1} parent=11 // pred_fallthru
          _
        // Predicated region
        $region17: #{tpu_custom_call.1} parent=11 // pred_check
          %p131 = pneg %p82
        $region18: #{tpu_custom_call.1} parent=11 // pred_check_branch
          %133 = sbr.rel (%p131) target = $region20
        $region19: #{tpu_custom_call.1} parent=11 // pred_region
          _
        $region20: #{tpu_custom_call.1} parent=11 // pred_fallthru
          _
      $region12: #{tpu_custom_call.1} parent=5 // pred_fallthru
        _
      %p134 = scmp.lt.s32.totalorder %s14, 2
      // Predicated region
      $region21: #{tpu_custom_call.1} parent=5 // pred_check
        %p135 = pneg %p134
      $region22: #{tpu_custom_call.1} parent=5 // pred_check_branch
        %137 = sbr.rel (%p135) target = $region24
      $region23: #{tpu_custom_call.1} parent=5 // pred_region
        // Predicated region
        $region25: #{tpu_custom_call.1} parent=23 // pred_check
          %p138 = pneg %p34
        $region26: #{tpu_custom_call.1} parent=23 // pred_check_branch
          %140 = sbr.rel (%p138) target = $region28
        $region27: #{tpu_custom_call.1} parent=23 // pred_region
          #allocation9 [shape = 'u32[6]{0}', space=smem, size = 0x18, scoped, tag = 'DMA stride descriptor']
          %s141 = sand.u32 %s24, 1
          %s142 = scalar_lea.sflag [#allocation3], %s141
          %s143 = sand.u32 %s24, 1
          %s144 = smul.addr %s143, 64
          %s145 = scalar_lea.vmem [#allocation2], %s144
          %s146 = smul.u32 4, %s14
          %s148 = ssub.s32 1024, 1024
          %149 = vsyncadd %s142, %s148
          %s150 = smul.addr %s146, 2
          %s151 = smul.addr %s150, 64
          %s152 = scalar_lea.hbm %s0, %s151
          %s154 = sshll.u32 1, 14
          %s155 = sxor.u32 4294967295, %s154
          %s157 = sld [smem:[#allocation0]]
          %s158 = sadd.s32 2, %s157
          %s160 = sshll.u32 7, 26
          %s161 = sxor.u32 4294967295, %s160
          %s162 = sand.u32 0, %s161
          %s163 = sshll.u32 %s158, 26
          %s164 = sor.u32 %s162, %s163
          %s165 = sshll.u32 %s145, 4
          %s166 = int_to_ptr.vmem [resolvable:$true] %s165
          %172 = sst [smem:[#allocation9]] 1024
          %s173 = scalar_lea.smem [#allocation9], 1
          %174 = sst [smem:[%s173]] 512
          %s175 = scalar_lea.smem [#allocation9], 2
          %176 = sst [smem:[%s175]] 4
          %s177 = scalar_lea.smem [#allocation9], 3
          %178 = sst [smem:[%s177]] 128
          %s179 = scalar_lea.smem [#allocation9], 4
          %180 = sst [smem:[%s179]] 128
          %s181 = scalar_lea.smem [#allocation9], 5
          %182 = sst [smem:[%s181]] 8
          %184 = dma.general %s152, 1024, %s166, %s142, [#allocation8], [#allocation9], %s164, 0
        $region28: #{tpu_custom_call.1} parent=23 // pred_fallthru
          _
      $region24: #{tpu_custom_call.1} parent=5 // pred_fallthru
        _
      %p185 = scmp.le.s32.totalorder 1, %s14
      %p186 = scmp.lt.s32.totalorder %s14, 3
      %p187 = pnand %p185, %p186
      %p188 = pneg %p187
      // Predicated region
      $region29: #{tpu_custom_call.1} parent=5 // pred_check
        _
      $region30: #{tpu_custom_call.1} parent=5 // pred_check_branch
        %190 = sbr.rel (%p187) target = $region32
      $region31: #{tpu_custom_call.1} parent=5 // pred_region
        %s191 = ssub.s32 %s14, 1
        %s192 = sand.u32 %s27, 1
        %s193 = scalar_lea.sflag [#allocation3], %s192
        %s194 = sand.u32 %s27, 1
        %s195 = smul.addr %s194, 64
        %s196 = scalar_lea.vmem [#allocation2], %s195
        // Predicated region
        $region33: #{tpu_custom_call.1} parent=31 // pred_check
          %p197 = pneg %p40
        $region34: #{tpu_custom_call.1} parent=31 // pred_check_branch
          %199 = sbr.rel (%p197) target = $region36
        $region35: #{tpu_custom_call.1} parent=31 // pred_region
          %200 = dma.done %s193, 1024
        $region36: #{tpu_custom_call.1} parent=31 // pred_fallthru
          _
        // Predicated region
        $region37: #{tpu_custom_call.1} parent=31 // pred_check
          %p201 = pneg %p61
        $region38: #{tpu_custom_call.1} parent=31 // pred_check_branch
          %203 = sbr.rel (%p201) target = $region40
        $region39: #{tpu_custom_call.1} parent=31 // pred_region
          %204 = dma.done [#allocation6], 4096
        $region40: #{tpu_custom_call.1} parent=31 // pred_fallthru
          _
        %s205 = sand.u32 %s27, 1
        %s206 = scalar_lea.sflag [#allocation3], %s205
        %s207 = sand.u32 %s27, 1
        %s208 = smul.addr %s207, 64
        %s209 = scalar_lea.vmem [#allocation2], %s208
        %p210 = pneg %p40
        %p211 = pneg %p37
        %p212 = pneg %p61
        %p213 = pneg %p58
        %p214 = pneg %p82
        %p215 = pneg %p79
        %p216 = pneg %p103
        %p217 = pneg %p100
        %s218 = smul.u32 4, %s19
        %p219 = scmp.eq.s32.totalorder %s19, 0
        // Predicated region
        $region41: #{tpu_custom_call.1} parent=31 // pred_check
          %p220 = pneg %p219
        $region42: #{tpu_custom_call.1} parent=31 // pred_check_branch
          %222 = sbr.rel (%p220) target = $region44
        $region43: #{tpu_custom_call.1} parent=31 // pred_region
          %223 = vst [vmem:[#allocation7] sm:$0xf] 0.0
        $region44: #{tpu_custom_call.1} parent=31 // pred_fallthru
          _
        %v224 = vld [vmem:[%s196] sm:$0xff]
        %v225 = vld [vmem:[%s196 + $0x8] sm:$0xff]
        %v226 = vld [vmem:[%s196 + $0x10] sm:$0xff]
        %v227 = vld [vmem:[%s196 + $0x18] sm:$0xff]
        %v228 = vld [vmem:[%s196 + $0x20] sm:$0xff]
        %v229 = vld [vmem:[%s196 + $0x28] sm:$0xff]
        %v230 = vld [vmem:[%s196 + $0x30] sm:$0xff]
        %v231 = vld [vmem:[%s196 + $0x38] sm:$0xff]
        %v232 = vld [vmem:[#allocation5] sm:$0xff]
        %v233 = vld [vmem:[#allocation5 + $0x8] sm:$0xff]
        %v234 = vld [vmem:[#allocation5 + $0x10] sm:$0xff]
        %v235 = vld [vmem:[#allocation5 + $0x18] sm:$0xff]
        %v236 = vld [vmem:[#allocation5 + $0x20] sm:$0xff]
        %v237 = vld [vmem:[#allocation5 + $0x28] sm:$0xff]
        %v238 = vld [vmem:[#allocation5 + $0x30] sm:$0xff]
        %v239 = vld [vmem:[#allocation5 + $0x38] sm:$0xff]
        %v240 = vld [vmem:[#allocation5 + $0x40] sm:$0xff]
        %v241 = vld [vmem:[#allocation5 + $0x48] sm:$0xff]
        %v242 = vld [vmem:[#allocation5 + $0x50] sm:$0xff]
        %v243 = vld [vmem:[#allocation5 + $0x58] sm:$0xff]
        %v244 = vld [vmem:[#allocation5 + $0x60] sm:$0xff]
        %v245 = vld [vmem:[#allocation5 + $0x68] sm:$0xff]
        %v246 = vld [vmem:[#allocation5 + $0x70] sm:$0xff]
        %v247 = vld [vmem:[#allocation5 + $0x78] sm:$0xff]
        %v248 = vld [vmem:[#allocation5 + $0x80] sm:$0xff]
        %v249 = vld [vmem:[#allocation5 + $0x88] sm:$0xff]
        %v250 = vld [vmem:[#allocation5 + $0x90] sm:$0xff]
        %v251 = vld [vmem:[#allocation5 + $0x98] sm:$0xff]
        %v252 = vld [vmem:[#allocation5 + $0xa0] sm:$0xff]
        %v253 = vld [vmem:[#allocation5 + $0xa8] sm:$0xff]
        %v254 = vld [vmem:[#allocation5 + $0xb0] sm:$0xff]
        %v255 = vld [vmem:[#allocation5 + $0xb8] sm:$0xff]
        %v256 = vld [vmem:[#allocation5 + $0xc0] sm:$0xff]
        %v257 = vld [vmem:[#allocation5 + $0xc8] sm:$0xff]
        %v258 = vld [vmem:[#allocation5 + $0xd0] sm:$0xff]
        %v259 = vld [vmem:[#allocation5 + $0xd8] sm:$0xff]
        %v260 = vld [vmem:[#allocation5 + $0xe0] sm:$0xff]
        %v261 = vld [vmem:[#allocation5 + $0xe8] sm:$0xff]
        %v262 = vld [vmem:[#allocation5 + $0xf0] sm:$0xff]
        %v263 = vld [vmem:[#allocation5 + $0xf8] sm:$0xff]
        %v264 = vld [vmem:[%s2] sm:$0x3]
        %v266 = vlaneseq
        %v267 = vshrl.u32 %v266, 7
        %v268 = vsub.s32 0, %v267
        %v269 = vrot.slane %v264, %v268
        %v270 = vlaneseq
        %v271 = vshrl.u32 %v270, 7
        %v272 = vsub.s32 1, %v271
        %v273 = vrot.slane %v264, %v272
        %v284 = vunpack.c.l.b16 %v224
        %v285 = vunpack.c.h.b16 %v224
        %v286 = vunpack.c.l.b16 %v225
        %v287 = vunpack.c.h.b16 %v225
        %v288 = vunpack.c.l.b16 %v226
        %v289 = vunpack.c.h.b16 %v226
        %v290 = vunpack.c.l.b16 %v227
        %v291 = vunpack.c.h.b16 %v227
        %v292 = vunpack.c.l.b16 %v228
        %v293 = vunpack.c.h.b16 %v228
        %v294 = vunpack.c.l.b16 %v229
        %v295 = vunpack.c.h.b16 %v229
        %v296 = vunpack.c.l.b16 %v230
        %v297 = vunpack.c.h.b16 %v230
        %v298 = vunpack.c.l.b16 %v231
        %v299 = vunpack.c.h.b16 %v231
        %v300 = vpack.c.b16 %v286, %v284
        %v301 = vpack.c.b16 %v287, %v285
        %v302 = vpack.c.b16 %v290, %v288
        %v303 = vpack.c.b16 %v291, %v289
        %v304 = vpack.c.b16 %v294, %v292
        %v305 = vpack.c.b16 %v295, %v293
        %v306 = vpack.c.b16 %v298, %v296
        %v307 = vpack.c.b16 %v299, %v297
        %v348 = vunpack.c.l.b16 %v232
        %v349 = vunpack.c.h.b16 %v232
        %v350 = vunpack.c.l.b16 %v233
        %v351 = vunpack.c.h.b16 %v233
        %v352 = vunpack.c.l.b16 %v234
        %v353 = vunpack.c.h.b16 %v234
        %v354 = vunpack.c.l.b16 %v235
        %v355 = vunpack.c.h.b16 %v235
        %v356 = vunpack.c.l.b16 %v236
        %v357 = vunpack.c.h.b16 %v236
        %v358 = vunpack.c.l.b16 %v237
        %v359 = vunpack.c.h.b16 %v237
        %v360 = vunpack.c.l.b16 %v238
        %v361 = vunpack.c.h.b16 %v238
        %v362 = vunpack.c.l.b16 %v239
        %v363 = vunpack.c.h.b16 %v239
        %v364 = vunpack.c.l.b16 %v240
        %v365 = vunpack.c.h.b16 %v240
        %v366 = vunpack.c.l.b16 %v241
        %v367 = vunpack.c.h.b16 %v241
        %v368 = vunpack.c.l.b16 %v242
        %v369 = vunpack.c.h.b16 %v242
        %v370 = vunpack.c.l.b16 %v243
        %v371 = vunpack.c.h.b16 %v243
        %v372 = vunpack.c.l.b16 %v244
        %v373 = vunpack.c.h.b16 %v244
        %v374 = vunpack.c.l.b16 %v245
        %v375 = vunpack.c.h.b16 %v245
        %v376 = vunpack.c.l.b16 %v246
        %v377 = vunpack.c.h.b16 %v246
        %v378 = vunpack.c.l.b16 %v247
        %v379 = vunpack.c.h.b16 %v247
        %v380 = vunpack.c.l.b16 %v248
        %v381 = vunpack.c.h.b16 %v248
        %v382 = vunpack.c.l.b16 %v249
        %v383 = vunpack.c.h.b16 %v249
        %v384 = vunpack.c.l.b16 %v250
        %v385 = vunpack.c.h.b16 %v250
        %v386 = vunpack.c.l.b16 %v251
        %v387 = vunpack.c.h.b16 %v251
        %v388 = vunpack.c.l.b16 %v252
        %v389 = vunpack.c.h.b16 %v252
        %v390 = vunpack.c.l.b16 %v253
        %v391 = vunpack.c.h.b16 %v253
        %v392 = vunpack.c.l.b16 %v254
        %v393 = vunpack.c.h.b16 %v254
        %v394 = vunpack.c.l.b16 %v255
        %v395 = vunpack.c.h.b16 %v255
        %v396 = vunpack.c.l.b16 %v256
        %v397 = vunpack.c.h.b16 %v256
        %v398 = vunpack.c.l.b16 %v257
        %v399 = vunpack.c.h.b16 %v257
        %v400 = vunpack.c.l.b16 %v258
        %v401 = vunpack.c.h.b16 %v258
        %v402 = vunpack.c.l.b16 %v259
        %v403 = vunpack.c.h.b16 %v259
        %v404 = vunpack.c.l.b16 %v260
        %v405 = vunpack.c.h.b16 %v260
        %v406 = vunpack.c.l.b16 %v261
        %v407 = vunpack.c.h.b16 %v261
        %v408 = vunpack.c.l.b16 %v262
        %v409 = vunpack.c.h.b16 %v262
        %v410 = vunpack.c.l.b16 %v263
        %v411 = vunpack.c.h.b16 %v263
        %v412 = vpack.c.b16 %v350, %v348
        %v413 = vpack.c.b16 %v351, %v349
        %v414 = vpack.c.b16 %v354, %v352
        %v415 = vpack.c.b16 %v355, %v353
        %v416 = vpack.c.b16 %v358, %v356
        %v417 = vpack.c.b16 %v359, %v357
        %v418 = vpack.c.b16 %v362, %v360
        %v419 = vpack.c.b16 %v363, %v361
        %v420 = vpack.c.b16 %v366, %v364
        %v421 = vpack.c.b16 %v367, %v365
        %v422 = vpack.c.b16 %v370, %v368
        %v423 = vpack.c.b16 %v371, %v369
        %v424 = vpack.c.b16 %v374, %v372
        %v425 = vpack.c.b16 %v375, %v373
        %v426 = vpack.c.b16 %v378, %v376
        %v427 = vpack.c.b16 %v379, %v377
        %v428 = vpack.c.b16 %v382, %v380
        %v429 = vpack.c.b16 %v383, %v381
        %v430 = vpack.c.b16 %v386, %v384
        %v431 = vpack.c.b16 %v387, %v385
        %v432 = vpack.c.b16 %v390, %v388
        %v433 = vpack.c.b16 %v391, %v389
        %v434 = vpack.c.b16 %v394, %v392
        %v435 = vpack.c.b16 %v395, %v393
        %v436 = vpack.c.b16 %v398, %v396
        %v437 = vpack.c.b16 %v399, %v397
        %v438 = vpack.c.b16 %v402, %v400
        %v439 = vpack.c.b16 %v403, %v401
        %v440 = vpack.c.b16 %v406, %v404
        %v441 = vpack.c.b16 %v407, %v405
        %v442 = vpack.c.b16 %v410, %v408
        %v443 = vpack.c.b16 %v411, %v409
        %476 = vmatprep.subr.bf16.mxu0 %v413
        %477 = vmatpush1.bf16.msra.mxu0 %v412
        %478 = vmatprep.subr.bf16.mxu0 %v415
        %479 = vmatpush1.bf16.msra.mxu0 %v414
        %480 = vmatprep.subr.bf16.mxu0 %v417
        %481 = vmatpush1.bf16.msra.mxu0 %v416
        %482 = vmatprep.subr.bf16.mxu0 %v419
        %483 = vmatpush1.bf16.msra.mxu0 %v418
        %484 = vmatprep.subr.bf16.mxu0 %v421
        %485 = vmatpush1.bf16.msra.mxu0 %v420
        %486 = vmatprep.subr.bf16.mxu0 %v423
        %487 = vmatpush1.bf16.msra.mxu0 %v422
        %488 = vmatprep.subr.bf16.mxu0 %v425
        %489 = vmatpush1.bf16.msra.mxu0 %v424
        %490 = vmatprep.subr.bf16.mxu0 %v427
        %491 = vmatpush1.bf16.msra.mxu0 %v426
        %492 = vmatprep.subr.bf16.mxu0 %v429
        %493 = vmatpush1.bf16.msra.mxu0 %v428
        %494 = vmatprep.subr.bf16.mxu0 %v431
        %495 = vmatpush1.bf16.msra.mxu0 %v430
        %496 = vmatprep.subr.bf16.mxu0 %v433
        %497 = vmatpush1.bf16.msra.mxu0 %v432
        %498 = vmatprep.subr.bf16.mxu0 %v435
        %499 = vmatpush1.bf16.msra.mxu0 %v434
        %500 = vmatprep.subr.bf16.mxu0 %v437
        %501 = vmatpush1.bf16.msra.mxu0 %v436
        %502 = vmatprep.subr.bf16.mxu0 %v439
        %503 = vmatpush1.bf16.msra.mxu0 %v438
        %504 = vmatprep.subr.bf16.mxu0 %v441
        %505 = vmatpush1.bf16.msra.mxu0 %v440
        %506 = vmatprep.subr.bf16.mxu0 %v443
        %507 = vmatpush1.bf16.msra.mxu0 %v442
        %508 = vmatprep.mubr.bf16.mxu0 %v301
        %509 = vmatmul.mubr.bf16.gmra.mrb[0].mxu0 %v300
        %v510 = vpop.f32.mrb[0].mxu0
        %v511 = vadd.f32 %v269, %v510
        %v512 = vpop.f32.mrb[0].mxu0
        %v513 = vadd.f32 %v273, %v512
        %v514 = vpop.f32.mrb[0].mxu0
        %v515 = vadd.f32 %v269, %v514
        %v516 = vpop.f32.mrb[0].mxu0
        %v517 = vadd.f32 %v273, %v516
        %518 = vmatprep.mubr.bf16.mxu0 %v303
        %519 = vmatmul.mubr.bf16.gmra.mrb[0].mxu0 %v302
        %v520 = vpop.f32.mrb[0].mxu0
        %v521 = vadd.f32 %v269, %v520
        %v522 = vpop.f32.mrb[0].mxu0
        %v523 = vadd.f32 %v273, %v522
        %v524 = vpop.f32.mrb[0].mxu0
        %v525 = vadd.f32 %v269, %v524
        %v526 = vpop.f32.mrb[0].mxu0
        %v527 = vadd.f32 %v273, %v526
        %528 = vmatprep.mubr.bf16.mxu0 %v305
        %529 = vmatmul.mubr.bf16.gmra.mrb[0].mxu0 %v304
        %v530 = vpop.f32.mrb[0].mxu0
        %v531 = vadd.f32 %v269, %v530
        %v532 = vpop.f32.mrb[0].mxu0
        %v533 = vadd.f32 %v273, %v532
        %v534 = vpop.f32.mrb[0].mxu0
        %v535 = vadd.f32 %v269, %v534
        %v536 = vpop.f32.mrb[0].mxu0
        %v537 = vadd.f32 %v273, %v536
        %538 = vmatprep.mubr.bf16.mxu0 %v307
        %539 = vmatmul.mubr.bf16.gmra.mrb[0].mxu0 %v306
        %v540 = vpop.f32.mrb[0].mxu0
        %v541 = vadd.f32 %v269, %v540
        %v542 = vpop.f32.mrb[0].mxu0
        %v543 = vadd.f32 %v273, %v542
        %v544 = vpop.f32.mrb[0].mxu0
        %v545 = vadd.f32 %v269, %v544
        %v546 = vpop.f32.mrb[0].mxu0
        %v547 = vadd.f32 %v273, %v546
        %548 = vdwg.mxu0
        %v549 = vmax.f32 %v511, 0.0
        %v550 = vmax.f32 %v513, 0.0
        %v551 = vmax.f32 %v515, 0.0
        %v552 = vmax.f32 %v517, 0.0
        %v553 = vmax.f32 %v521, 0.0
        %v554 = vmax.f32 %v523, 0.0
        %v555 = vmax.f32 %v525, 0.0
        %v556 = vmax.f32 %v527, 0.0
        %v557 = vmax.f32 %v531, 0.0
        %v558 = vmax.f32 %v533, 0.0
        %v559 = vmax.f32 %v535, 0.0
        %v560 = vmax.f32 %v537, 0.0
        %v561 = vmax.f32 %v541, 0.0
        %v562 = vmax.f32 %v543, 0.0
        %v563 = vmax.f32 %v545, 0.0
        %v564 = vmax.f32 %v547, 0.0
        %v565 = vld [vmem:[#allocation7] sm:$0xf]
        %v566 = vadd.f32 %v549, %v551
        %v567 = vadd.f32 %v566, %v553
        %v568 = vadd.f32 %v567, %v555
        %v569 = vrot.slane %v568, 4
        %v570 = vadd.f32 %v568, %v569
        %v571 = vrot.slane %v570, 2
        %v572 = vadd.f32 %v570, %v571
        %v573 = vrot.slane %v572, 1
        %v574 = vadd.f32 %v572, %v573
        %v575 = vadd.f32 %v550, %v552
        %v576 = vadd.f32 %v575, %v554
        %v577 = vadd.f32 %v576, %v556
        %v578 = vrot.slane %v577, 4
        %v579 = vadd.f32 %v577, %v578
        %v580 = vrot.slane %v579, 2
        %v581 = vadd.f32 %v579, %v580
        %v582 = vrot.slane %v581, 1
        %v583 = vadd.f32 %v581, %v582
        %v584 = vadd.f32 %v557, %v559
        %v585 = vadd.f32 %v584, %v561
        %v586 = vadd.f32 %v585, %v563
        %v587 = vrot.slane %v586, 4
        %v588 = vadd.f32 %v586, %v587
        %v589 = vrot.slane %v588, 2
        %v590 = vadd.f32 %v588, %v589
        %v591 = vrot.slane %v590, 1
        %v592 = vadd.f32 %v590, %v591
        %v593 = vadd.f32 %v558, %v560
        %v594 = vadd.f32 %v593, %v562
        %v595 = vadd.f32 %v594, %v564
        %v596 = vrot.slane %v595, 4
        %v597 = vadd.f32 %v595, %v596
        %v598 = vrot.slane %v597, 2
        %v599 = vadd.f32 %v597, %v598
        %v600 = vrot.slane %v599, 1
        %v601 = vadd.f32 %v599, %v600
        %v606 = vcombine.low %v574, %v583
        %v608 = vunpack.c.l.s4 1983009808
        %v609 = vunpack.c.0.s8 %v608
        %v610 = vlaneseq
        %v611 = vshrl.u32 %v610, 7
        %v612 = vsub.s32 %v609, %v611
        %v613 = vrot.slane %v606, %v612
        %v614 = vcombine.low %v592, %v601
        %v616 = vunpack.c.l.s4 1983009808
        %v617 = vunpack.c.0.s8 %v616
        %v618 = vlaneseq
        %v619 = vshrl.u32 %v618, 7
        %v620 = vsub.s32 %v617, %v619
        %v621 = vrot.slane %v614, %v620
        %vm622 = vcmask 1044484
        %v623 = vsel %vm622, %v613, %v613
        %vm624 = vcmask 1046534
        %v625 = vsel %vm624, %v613, %v623
        %v626 = vrot.slane %v621, 7
        %vm627 = vcmask 1041409
        %v628 = vsel %vm627, %v626, %v625
        %vm629 = vcmask 1043459
        %v630 = vsel %vm629, %v626, %v628
        %vm631 = vcmask 1045509
        %v632 = vsel %vm631, %v626, %v630
        %vm633 = vcmask 1047559
        %v634 = vsel %vm633, %v626, %v632
        %v636 = vadd.f32 %v565, %v634
        %637 = vst [vmem:[#allocation7] sm:$0xf] %v636
        %p638 = scmp.eq.s32.totalorder %s19, 1
        // Predicated region
        $region45: #{tpu_custom_call.1} parent=31 // pred_check
          %p639 = pneg %p638
        $region46: #{tpu_custom_call.1} parent=31 // pred_check_branch
          %641 = sbr.rel (%p639) target = $region48
        $region47: #{tpu_custom_call.1} parent=31 // pred_region
          %v642 = vld [vmem:[#allocation7] sm:$0xf]
          %v643 = vmul.f32 %v642, 0.015625
          %644 = vst [vmem:[#allocation7] sm:$0xf] %v643
        $region48: #{tpu_custom_call.1} parent=31 // pred_fallthru
          _
        // Predicated region
        $region49: #{tpu_custom_call.1} parent=31 // pred_check
          %p645 = pneg %p100
        $region50: #{tpu_custom_call.1} parent=31 // pred_check_branch
          %647 = sbr.rel (%p645) target = $region52
        $region51: #{tpu_custom_call.1} parent=31 // pred_region
          %s649 = ssub.s32 64, 64
          %650 = vsyncadd [#allocation4], %s649
          %s652 = sshll.u32 [#allocation7], 4
          %s653 = int_to_ptr.vmem [resolvable:$true] %s652
          %655 = dma.vmem_to_hbm [thread:$0]  %s653, 64, %s3, [#allocation4]
        $region52: #{tpu_custom_call.1} parent=31 // pred_fallthru
          _
        // Predicated region
        $region53: #{tpu_custom_call.1} parent=31 // pred_check
          %p656 = pneg %p100
        $region54: #{tpu_custom_call.1} parent=31 // pred_check_branch
          %658 = sbr.rel (%p656) target = $region56
        $region55: #{tpu_custom_call.1} parent=31 // pred_region
          %659 = dma.done [#allocation4], 64
        $region56: #{tpu_custom_call.1} parent=31 // pred_fallthru
          _
      $region32: #{tpu_custom_call.1} parent=5 // pred_fallthru
        _
      %p660 = scmp.le.s32.totalorder 2, %s14
      // Predicated region
      $region57: #{tpu_custom_call.1} parent=5 // pred_check
        %p661 = pneg %p660
      $region58: #{tpu_custom_call.1} parent=5 // pred_check_branch
        %663 = sbr.rel (%p661) target = $region60
      $region59: #{tpu_custom_call.1} parent=5 // pred_region
        %s664 = ssub.s32 %s14, 2
      $region60: #{tpu_custom_call.1} parent=5 // pred_fallthru
        _
    $region6: #{tpu_custom_call.1} parent=1 // loop_footer
      %s18 = sadd.s32 1, %s14
    $region7: #{tpu_custom_call.1} parent=1 // loop_footer_branch
      %13 = sbr.rel target = $region3
    $region8: #{tpu_custom_call.1} parent=1 // loop_exit
      _
    %665 = vsyncpa [#allocation3], 1
    %s666 = scalar_lea.sflag [#allocation3], 1
    %667 = vsyncpa %s666, 1
    %668 = vsyncpa [#allocation6], 1
    %669 = vsyncpa [#allocation4], 1
    %s670 = scalar_lea.sflag [#allocation4], 1
    %671 = vsyncpa %s670, 1

</llo_original>
